<compile_context>
chip_gen: v7x
topology: tpu7x:2x2x1
jax: 0.10.0
libtpu: 0.0.40
codegen_flags: <defaults>
</compile_context>

<pallas_src>
import jax
import jax.numpy as jnp
from jax import lax
from jax.experimental import pallas as pl
from jax.experimental.pallas import tpu as pltpu


def _linear_kernel(x_ref, w_ref, b_ref, o_ref):
    # x_ref: (tm, K)   activations (any float dtype)
    # w_ref: (N, K)    weight in nn.Linear layout, VMEM-resident across tiles
    # b_ref: (1, N)    bias (f32)
    # o_ref: (tm, N)   output (x dtype), lane-dense full-N store
    x = x_ref[...].astype(w_ref.dtype)          # bf16 MXU path if W is bf16
    acc = lax.dot_general(                      # contract last dims: x @ W.T
        x, w_ref[...],
        dimension_numbers=(((1,), (1,)), ((), ())),
        preferred_element_type=jnp.float32)     # f32 accumulation
    o_ref[...] = (acc + b_ref[...].astype(jnp.float32)).astype(o_ref.dtype)


def vision_proj(x, weight, bias, *, tm=None):
    """y = x @ weight.T + bias  (nn.Linear semantics).

    x:      (..., K)  float
    weight: (N, K)    PyTorch nn.Linear.weight layout (any float dtype; cast to
                      bf16 once at load time for best perf)
    bias:   (N,) or (1, N) float32
    returns (..., N)  in x.dtype
    """
    K = x.shape[-1]
    N, K_w = weight.shape
    assert K == K_w, f"ve_hidden_size mismatch: x has {K}, weight has {K_w}"
    if bias.ndim == 1:
        bias = bias.reshape(1, N)               # metadata-only reshape

    lead_shape = x.shape[:-1]
    x2d = x.reshape(-1, K)
    M = x2d.shape[0]

    if tm is None:
        tm = min(M, 256)                        # MXU-aligned cap; full M if small
    grid_m = pl.cdiv(M, tm)                     # partial last tile handled by Pallas

    cost = pl.CostEstimate(
        flops=2 * M * K * N,
        transcendentals=0,
        bytes_accessed=(x2d.size * x2d.dtype.itemsize
                        + weight.size * weight.dtype.itemsize
                        + bias.size * bias.dtype.itemsize
                        + M * N * x.dtype.itemsize))

    out = pl.pallas_call(
        _linear_kernel,
        out_shape=jax.ShapeDtypeStruct((M, N), x.dtype),
        grid_spec=pltpu.PrefetchScalarGridSpec(
            num_scalar_prefetch=0,
            grid=(grid_m,),
            in_specs=[
                pl.BlockSpec((tm, K), lambda i: (i, 0)),   # x row tile, full K
                pl.BlockSpec((N, K), lambda i: (0, 0)),    # weight: fetched once, resident
                pl.BlockSpec((1, N), lambda i: (0, 0)),    # bias: resident
            ],
            out_specs=pl.BlockSpec((tm, N), lambda i: (i, 0)),  # lane-dense full-N store
        ),
        compiler_params=pltpu.CompilerParams(
            dimension_semantics=("parallel",)),             # row tiles split across TCs (v7x)
        cost_estimate=cost,
    )(x2d, weight, bias)

    return out.reshape(*lead_shape, N)


if __name__ == "__main__":
    # Module defaults: ve_hidden_size=768, hidden_size=512.
    ve_hidden_size = 768
    hidden_size = 512
    B, S = 2, 8

    key = jax.random.PRNGKey(0)
    k_x, k_w, k_b = jax.random.split(key, 3)

    # Parameters in nn.Linear layout. The bf16 cast is done ONCE here
    # ("parameter-load time"), not per call.
    weight_f32 = jax.random.normal(k_w, (hidden_size, ve_hidden_size),
                                   dtype=jnp.float32) * 0.02
    bias = jax.random.normal(k_b, (hidden_size,), dtype=jnp.float32) * 0.02
    weight_bf16 = weight_f32.astype(jnp.bfloat16)

    # image_encoders: (batch, seq, ve_hidden_size)
    x = jax.random.normal(k_x, (B, S, ve_hidden_size), dtype=jnp.float32)

    # Small case: M = 16 -> single grid step, weight resident, 512-wide store.
    y = vision_proj(x, weight_bf16, bias)
    y = jax.block_until_ready(y)
    assert y.shape == (B, S, hidden_size)

    # Reference with the same bf16-matmul / f32-accumulate math.
    y_ref_bf16 = (jnp.dot(x.astype(jnp.bfloat16), weight_bf16.T,
                          preferred_element_type=jnp.float32) + bias)
    # Pure f32 nn.Linear reference (looser tolerance: bf16 rounding of inputs).
    y_ref_f32 = x @ weight_f32.T + bias
    assert jnp.allclose(y, y_ref_bf16, atol=2e-3, rtol=2e-3)
    assert jnp.allclose(y, y_ref_f32, atol=5e-2, rtol=5e-2)

    # Tiled path sanity check (M not a multiple of tm -> partial last block).
    x_big = jax.random.normal(jax.random.PRNGKey(1), (2, 300, ve_hidden_size),
                              dtype=jnp.float32)
    y_big = jax.block_until_ready(vision_proj(x_big, weight_bf16, bias))
    y_big_ref = (jnp.dot(x_big.astype(jnp.bfloat16), weight_bf16.T,
                         preferred_element_type=jnp.float32) + bias)
    assert y_big.shape == (2, 300, hidden_size)
    assert jnp.allclose(y_big, y_big_ref, atol=2e-3, rtol=2e-3)

    print("KERNEL_OK")
</pallas_src>

<mosaic_0001>
module attributes {stable_mosaic.version = 11 : i64} {
  func.func @_linear_kernel(%arg0: i32, %arg1: memref<16x768xf32, #tpu.memory_space<vmem>>, %arg2: memref<512x768xbf16, #tpu.memory_space<vmem>>, %arg3: memref<1x512xf32, #tpu.memory_space<vmem>>, %arg4: memref<16x512xf32, #tpu.memory_space<vmem>>) attributes {dimension_semantics = [#tpu.dimension_semantics<parallel>], iteration_bounds = array<i64: 1>, scalar_prefetch = 0 : i64, scratch_operands = 0 : i64, tpu.core_type = #tpu.core_type<tc>, window_params = [{transform_indices = @transform_0, window_bounds = array<i64: 16, 768>}, {pipeline_mode = #tpu.pipeline_mode<synchronous>, transform_indices = @transform_1, window_bounds = array<i64: 512, 768>}, {pipeline_mode = #tpu.pipeline_mode<synchronous>, transform_indices = @transform_2, window_bounds = array<i64: 1, 512>}, {transform_indices = @transform_3, window_bounds = array<i64: 16, 512>}]} {
    %c0 = arith.constant 0 : index
    %c0_0 = arith.constant 0 : index
    %0 = vector.load %arg1[%c0, %c0_0] : memref<16x768xf32, #tpu.memory_space<vmem>>, vector<16x768xf32>
    %1 = arith.truncf %0 : vector<16x768xf32> to vector<16x768xbf16>
    %c0_1 = arith.constant 0 : index
    %c0_2 = arith.constant 0 : index
    %2 = vector.load %arg2[%c0_1, %c0_2] : memref<512x768xbf16, #tpu.memory_space<vmem>>, vector<512x768xbf16>
    %cst = arith.constant dense<0.000000e+00> : vector<16x512xf32>
    %3 = tpu.matmul %1, %2, %cst {dimension_numbers = #tpu.dot_dimension_numbers<[1], [1], [0], [0], [0, 0, 1, 0], [], []>} : vector<16x768xbf16>, vector<512x768xbf16>, vector<16x512xf32> -> vector<16x512xf32>
    %c0_3 = arith.constant 0 : index
    %c0_4 = arith.constant 0 : index
    %4 = vector.load %arg3[%c0_3, %c0_4] : memref<1x512xf32, #tpu.memory_space<vmem>>, vector<1x512xf32>
    %5 = vector.broadcast %4 : vector<1x512xf32> to vector<16x512xf32>
    %6 = arith.addf %3, %5 : vector<16x512xf32>
    %c0_5 = arith.constant 0 : index
    %c0_6 = arith.constant 0 : index
    %7 = vector.load %arg4[%c0_5, %c0_6] : memref<16x512xf32, #tpu.memory_space<vmem>>, vector<16x512xf32>
    tpu.vector_store %arg4[%c0_5, %c0_6], %6 {strides = array<i32>} : memref<16x512xf32, #tpu.memory_space<vmem>>, vector<16x512xf32>,
    return
  }
  func.func @transform_0(%arg0: i32) -> (i32, i32) {
    %c0_i32 = arith.constant 0 : i32
    %c0_i32_0 = arith.constant 0 : i32
    return %arg0, %c0_i32 : i32, i32
  }
  func.func @transform_1(%arg0: i32) -> (i32, i32) {
    %c0_i32 = arith.constant 0 : i32
    %c0_i32_0 = arith.constant 0 : i32
    %c0_i32_1 = arith.constant 0 : i32
    return %c0_i32, %c0_i32_0 : i32, i32
  }
  func.func @transform_2(%arg0: i32) -> (i32, i32) {
    %c0_i32 = arith.constant 0 : i32
    %c0_i32_0 = arith.constant 0 : i32
    %c0_i32_1 = arith.constant 0 : i32
    return %c0_i32, %c0_i32_0 : i32, i32
  }
  func.func @transform_3(%arg0: i32) -> (i32, i32) {
    %c0_i32 = arith.constant 0 : i32
    %c0_i32_0 = arith.constant 0 : i32
    return %arg0, %c0_i32 : i32, i32
  }
}

</mosaic_0001>

<llo_original>
// kernel: tpu_custom_call.1
$region0: #{tpu_custom_call.1}
  #allocation0 [shape = 'u32[]', space=smem, size = 0x4, offset = 0x4, fixed_abs, tag = 'smem constant byte address 0x4 - core index']
  #allocation1 [shape = 'u32[144,128]{1,0:T(1,128)}', space=vmem, size = 0x12000, scoped, tag = 'internal scratch']
  %s0 = inlined_call_operand.hbm [shape: f32[16,768], index: 0, kind: input, shape index: {}]
  %s1 = inlined_call_operand.hbm [shape: bf16[512,768], index: 1, kind: input, shape index: {}]
  %s2 = inlined_call_operand.vmem [shape: f32[1,512], index: 2, kind: input, shape index: {}]
  %s3 = inlined_call_operand.hbm [shape: f32[16,512], index: 3, kind: output, shape index: {}]
  %s4 = sld [smem:[#allocation0]]
  $region30: #{tpu_custom_call.1} parent=0
    _
  %s6 = ssub.s32 1, %s4
  %s7 = scalar_select 0, %s6, %s4
  $region1: #{tpu_custom_call.1} parent=0
    #allocation2 [shape = 'u8[49152]{0}', space=vmem, size = 0xc000, scoped, tag = 'input window, operand 0, single buffered']
    #allocation3 [shape = 's32[1]{0}', space=sflag, size = 0x4, scoped, tag = 'scoped memory for tpu_custom_call.1']
    #allocation4 [shape = 's32[1]{0}', space=sflag, size = 0x4, scoped, tag = 'scoped memory for tpu_custom_call.1']
    #allocation5 [shape = 'u8[786432]{0}', space=vmem, size = 0xc0000, scoped, tag = 'input window, operand 1, single buffered']
    #allocation6 [shape = 's32[1]{0}', space=sflag, size = 0x4, scoped, tag = 'scoped memory for tpu_custom_call.1']
    #allocation7 [shape = 'u8[32768]{0}', space=vmem, size = 0x8000, scoped, tag = 'output window, operand 0, single buffered']
    %8 = vsyncpa [#allocation3], 0
    %9 = vsyncpa [#allocation6], 0
    %10 = vsyncpa [#allocation4], 0
    // Predicated region
    $region2: #{tpu_custom_call.1} parent=1 // pred_check
      _
    $region3: #{tpu_custom_call.1} parent=1 // pred_check_branch
      %12 = sbr.rel (0) target = $region5
    $region4: #{tpu_custom_call.1} parent=1 // pred_region
      %s14 = ssub.s32 1536, 1536
      %15 = vsyncadd [#allocation3], %s14
      %s16 = sshll.u32 [#allocation2], 4
      %s17 = int_to_ptr.vmem [resolvable:$true] %s16
      %22 = dma.hbm_to_vmem [thread:$0]  %s0, 1536, %s17, [#allocation3], 768, 768, 48
    $region5: #{tpu_custom_call.1} parent=1 // pred_fallthru
      _
    // Predicated region
    $region6: #{tpu_custom_call.1} parent=1 // pred_check
      _
    $region7: #{tpu_custom_call.1} parent=1 // pred_check_branch
      %24 = sbr.rel (0) target = $region9
    $region8: #{tpu_custom_call.1} parent=1 // pred_region
      %s26 = ssub.s32 24576, 24576
      %27 = vsyncadd [#allocation6], %s26
      %s28 = sshll.u32 [#allocation5], 4
      %s29 = int_to_ptr.vmem [resolvable:$true] %s28
      %34 = dma.hbm_to_vmem [thread:$0]  %s1, 24576, %s29, [#allocation6], 384, 384, 24
    $region9: #{tpu_custom_call.1} parent=1 // pred_fallthru
      _
    // Predicated region
    $region10: #{tpu_custom_call.1} parent=1 // pred_check
      _
    $region11: #{tpu_custom_call.1} parent=1 // pred_check_branch
      %36 = sbr.rel (0) target = $region13
    $region12: #{tpu_custom_call.1} parent=1 // pred_region
      _
    $region13: #{tpu_custom_call.1} parent=1 // pred_fallthru
      _
    // Predicated region
    $region14: #{tpu_custom_call.1} parent=1 // pred_check
      _
    $region15: #{tpu_custom_call.1} parent=1 // pred_check_branch
      %38 = sbr.rel (0) target = $region17
    $region16: #{tpu_custom_call.1} parent=1 // pred_region
      %39 = dma.done [#allocation3], 1536
    $region17: #{tpu_custom_call.1} parent=1 // pred_fallthru
      _
    // Predicated region
    $region18: #{tpu_custom_call.1} parent=1 // pred_check
      _
    $region19: #{tpu_custom_call.1} parent=1 // pred_check_branch
      %41 = sbr.rel (0) target = $region21
    $region20: #{tpu_custom_call.1} parent=1 // pred_region
      %42 = dma.done [#allocation6], 24576
    $region21: #{tpu_custom_call.1} parent=1 // pred_fallthru
      _
    %v43 = vld [vmem:[#allocation2] sm:$0xff]
    %v44 = vld [vmem:[#allocation2 + $0x8] sm:$0xff]
    %v45 = vld [vmem:[#allocation2 + $0x10] sm:$0xff]
    %v46 = vld [vmem:[#allocation2 + $0x18] sm:$0xff]
    %v47 = vld [vmem:[#allocation2 + $0x20] sm:$0xff]
    %v48 = vld [vmem:[#allocation2 + $0x28] sm:$0xff]
    %v49 = vld [vmem:[#allocation2 + $0x30] sm:$0xff]
    %v50 = vld [vmem:[#allocation2 + $0x38] sm:$0xff]
    %v51 = vld [vmem:[#allocation2 + $0x40] sm:$0xff]
    %v52 = vld [vmem:[#allocation2 + $0x48] sm:$0xff]
    %v53 = vld [vmem:[#allocation2 + $0x50] sm:$0xff]
    %v54 = vld [vmem:[#allocation2 + $0x58] sm:$0xff]
    %v55 = vpack.c.bf16 %v49, %v43
    %v56 = vpack.c.bf16 %v50, %v44
    %v57 = vpack.c.bf16 %v51, %v45
    %v58 = vpack.c.bf16 %v52, %v46
    %v59 = vpack.c.bf16 %v53, %v47
    %v60 = vpack.c.bf16 %v54, %v48
    %v61 = vld [vmem:[#allocation5] sm:$0xff]
    %v62 = vld [vmem:[#allocation5 + $0x8] sm:$0xff]
    %v63 = vld [vmem:[#allocation5 + $0x10] sm:$0xff]
    %v64 = vld [vmem:[#allocation5 + $0x18] sm:$0xff]
    %v65 = vld [vmem:[#allocation5 + $0x20] sm:$0xff]
    %v66 = vld [vmem:[#allocation5 + $0x28] sm:$0xff]
    %v67 = vld [vmem:[#allocation5 + $0x30] sm:$0xff]
    %v68 = vld [vmem:[#allocation5 + $0x38] sm:$0xff]
    %v69 = vld [vmem:[#allocation5 + $0x40] sm:$0xff]
    %v70 = vld [vmem:[#allocation5 + $0x48] sm:$0xff]
    %v71 = vld [vmem:[#allocation5 + $0x50] sm:$0xff]
    %v72 = vld [vmem:[#allocation5 + $0x58] sm:$0xff]
    %v73 = vld [vmem:[#allocation5 + $0x60] sm:$0xff]
    %v74 = vld [vmem:[#allocation5 + $0x68] sm:$0xff]
    %v75 = vld [vmem:[#allocation5 + $0x70] sm:$0xff]
    %v76 = vld [vmem:[#allocation5 + $0x78] sm:$0xff]
    %v77 = vld [vmem:[#allocation5 + $0x80] sm:$0xff]
    %v78 = vld [vmem:[#allocation5 + $0x88] sm:$0xff]
    %v79 = vld [vmem:[#allocation5 + $0x90] sm:$0xff]
    %v80 = vld [vmem:[#allocation5 + $0x98] sm:$0xff]
    %v81 = vld [vmem:[#allocation5 + $0xa0] sm:$0xff]
    %v82 = vld [vmem:[#allocation5 + $0xa8] sm:$0xff]
    %v83 = vld [vmem:[#allocation5 + $0xb0] sm:$0xff]
    %v84 = vld [vmem:[#allocation5 + $0xb8] sm:$0xff]
    %v85 = vld [vmem:[#allocation5 + $0xc0] sm:$0xff]
    %v86 = vld [vmem:[#allocation5 + $0xc8] sm:$0xff]
    %v87 = vld [vmem:[#allocation5 + $0xd0] sm:$0xff]
    %v88 = vld [vmem:[#allocation5 + $0xd8] sm:$0xff]
    %v89 = vld [vmem:[#allocation5 + $0xe0] sm:$0xff]
    %v90 = vld [vmem:[#allocation5 + $0xe8] sm:$0xff]
    %v91 = vld [vmem:[#allocation5 + $0xf0] sm:$0xff]
    %v92 = vld [vmem:[#allocation5 + $0xf8] sm:$0xff]
    %v93 = vld [vmem:[#allocation5 + $0x100] sm:$0xff]
    %v94 = vld [vmem:[#allocation5 + $0x108] sm:$0xff]
    %v95 = vld [vmem:[#allocation5 + $0x110] sm:$0xff]
    %v96 = vld [vmem:[#allocation5 + $0x118] sm:$0xff]
    %v97 = vld [vmem:[#allocation5 + $0x120] sm:$0xff]
    %v98 = vld [vmem:[#allocation5 + $0x128] sm:$0xff]
    %v99 = vld [vmem:[#allocation5 + $0x130] sm:$0xff]
    %v100 = vld [vmem:[#allocation5 + $0x138] sm:$0xff]
    %v101 = vld [vmem:[#allocation5 + $0x140] sm:$0xff]
    %v102 = vld [vmem:[#allocation5 + $0x148] sm:$0xff]
    %v103 = vld [vmem:[#allocation5 + $0x150] sm:$0xff]
    %v104 = vld [vmem:[#allocation5 + $0x158] sm:$0xff]
    %v105 = vld [vmem:[#allocation5 + $0x160] sm:$0xff]
    %v106 = vld [vmem:[#allocation5 + $0x168] sm:$0xff]
    %v107 = vld [vmem:[#allocation5 + $0x170] sm:$0xff]
    %v108 = vld [vmem:[#allocation5 + $0x178] sm:$0xff]
    %v109 = vld [vmem:[#allocation5 + $0x180] sm:$0xff]
    %v110 = vld [vmem:[#allocation5 + $0x188] sm:$0xff]
    %v111 = vld [vmem:[#allocation5 + $0x190] sm:$0xff]
    %v112 = vld [vmem:[#allocation5 + $0x198] sm:$0xff]
    %v113 = vld [vmem:[#allocation5 + $0x1a0] sm:$0xff]
    %v114 = vld [vmem:[#allocation5 + $0x1a8] sm:$0xff]
    %v115 = vld [vmem:[#allocation5 + $0x1b0] sm:$0xff]
    %v116 = vld [vmem:[#allocation5 + $0x1b8] sm:$0xff]
    %v117 = vld [vmem:[#allocation5 + $0x1c0] sm:$0xff]
    %v118 = vld [vmem:[#allocation5 + $0x1c8] sm:$0xff]
    %v119 = vld [vmem:[#allocation5 + $0x1d0] sm:$0xff]
    %v120 = vld [vmem:[#allocation5 + $0x1d8] sm:$0xff]
    %v121 = vld [vmem:[#allocation5 + $0x1e0] sm:$0xff]
    %v122 = vld [vmem:[#allocation5 + $0x1e8] sm:$0xff]
    %v123 = vld [vmem:[#allocation5 + $0x1f0] sm:$0xff]
    %v124 = vld [vmem:[#allocation5 + $0x1f8] sm:$0xff]
    %v125 = vld [vmem:[#allocation5 + $0x200] sm:$0xff]
    %v126 = vld [vmem:[#allocation5 + $0x208] sm:$0xff]
    %v127 = vld [vmem:[#allocation5 + $0x210] sm:$0xff]
    %v128 = vld [vmem:[#allocation5 + $0x218] sm:$0xff]
    %v129 = vld [vmem:[#allocation5 + $0x220] sm:$0xff]
    %v130 = vld [vmem:[#allocation5 + $0x228] sm:$0xff]
    %v131 = vld [vmem:[#allocation5 + $0x230] sm:$0xff]
    %v132 = vld [vmem:[#allocation5 + $0x238] sm:$0xff]
    %v133 = vld [vmem:[#allocation5 + $0x240] sm:$0xff]
    %v134 = vld [vmem:[#allocation5 + $0x248] sm:$0xff]
    %v135 = vld [vmem:[#allocation5 + $0x250] sm:$0xff]
    %v136 = vld [vmem:[#allocation5 + $0x258] sm:$0xff]
    %v137 = vld [vmem:[#allocation5 + $0x260] sm:$0xff]
    %v138 = vld [vmem:[#allocation5 + $0x268] sm:$0xff]
    %v139 = vld [vmem:[#allocation5 + $0x270] sm:$0xff]
    %v140 = vld [vmem:[#allocation5 + $0x278] sm:$0xff]
    %v141 = vld [vmem:[#allocation5 + $0x280] sm:$0xff]
    %v142 = vld [vmem:[#allocation5 + $0x288] sm:$0xff]
    %v143 = vld [vmem:[#allocation5 + $0x290] sm:$0xff]
    %v144 = vld [vmem:[#allocation5 + $0x298] sm:$0xff]
    %v145 = vld [vmem:[#allocation5 + $0x2a0] sm:$0xff]
    %v146 = vld [vmem:[#allocation5 + $0x2a8] sm:$0xff]
    %v147 = vld [vmem:[#allocation5 + $0x2b0] sm:$0xff]
    %v148 = vld [vmem:[#allocation5 + $0x2b8] sm:$0xff]
    %v149 = vld [vmem:[#allocation5 + $0x2c0] sm:$0xff]
    %v150 = vld [vmem:[#allocation5 + $0x2c8] sm:$0xff]
    %v151 = vld [vmem:[#allocation5 + $0x2d0] sm:$0xff]
    %v152 = vld [vmem:[#allocation5 + $0x2d8] sm:$0xff]
    %v153 = vld [vmem:[#allocation5 + $0x2e0] sm:$0xff]
    %v154 = vld [vmem:[#allocation5 + $0x2e8] sm:$0xff]
    %v155 = vld [vmem:[#allocation5 + $0x2f0] sm:$0xff]
    %v156 = vld [vmem:[#allocation5 + $0x2f8] sm:$0xff]
    %v157 = vld [vmem:[#allocation5 + $0x300] sm:$0xff]
    %v158 = vld [vmem:[#allocation5 + $0x308] sm:$0xff]
    %v159 = vld [vmem:[#allocation5 + $0x310] sm:$0xff]
    %v160 = vld [vmem:[#allocation5 + $0x318] sm:$0xff]
    %v161 = vld [vmem:[#allocation5 + $0x320] sm:$0xff]
    %v162 = vld [vmem:[#allocation5 + $0x328] sm:$0xff]
    %v163 = vld [vmem:[#allocation5 + $0x330] sm:$0xff]
    %v164 = vld [vmem:[#allocation5 + $0x338] sm:$0xff]
    %v165 = vld [vmem:[#allocation5 + $0x340] sm:$0xff]
    %v166 = vld [vmem:[#allocation5 + $0x348] sm:$0xff]
    %v167 = vld [vmem:[#allocation5 + $0x350] sm:$0xff]
    %v168 = vld [vmem:[#allocation5 + $0x358] sm:$0xff]
    %v169 = vld [vmem:[#allocation5 + $0x360] sm:$0xff]
    %v170 = vld [vmem:[#allocation5 + $0x368] sm:$0xff]
    %v171 = vld [vmem:[#allocation5 + $0x370] sm:$0xff]
    %v172 = vld [vmem:[#allocation5 + $0x378] sm:$0xff]
    %v173 = vld [vmem:[#allocation5 + $0x380] sm:$0xff]
    %v174 = vld [vmem:[#allocation5 + $0x388] sm:$0xff]
    %v175 = vld [vmem:[#allocation5 + $0x390] sm:$0xff]
    %v176 = vld [vmem:[#allocation5 + $0x398] sm:$0xff]
    %v177 = vld [vmem:[#allocation5 + $0x3a0] sm:$0xff]
    %v178 = vld [vmem:[#allocation5 + $0x3a8] sm:$0xff]
    %v179 = vld [vmem:[#allocation5 + $0x3b0] sm:$0xff]
    %v180 = vld [vmem:[#allocation5 + $0x3b8] sm:$0xff]
    %v181 = vld [vmem:[#allocation5 + $0x3c0] sm:$0xff]
    %v182 = vld [vmem:[#allocation5 + $0x3c8] sm:$0xff]
    %v183 = vld [vmem:[#allocation5 + $0x3d0] sm:$0xff]
    %v184 = vld [vmem:[#allocation5 + $0x3d8] sm:$0xff]
    %v185 = vld [vmem:[#allocation5 + $0x3e0] sm:$0xff]
    %v186 = vld [vmem:[#allocation5 + $0x3e8] sm:$0xff]
    %v187 = vld [vmem:[#allocation5 + $0x3f0] sm:$0xff]
    %v188 = vld [vmem:[#allocation5 + $0x3f8] sm:$0xff]
    %v189 = vld [vmem:[#allocation5 + $0x400] sm:$0xff]
    %v190 = vld [vmem:[#allocation5 + $0x408] sm:$0xff]
    %v191 = vld [vmem:[#allocation5 + $0x410] sm:$0xff]
    %v192 = vld [vmem:[#allocation5 + $0x418] sm:$0xff]
    %v193 = vld [vmem:[#allocation5 + $0x420] sm:$0xff]
    %v194 = vld [vmem:[#allocation5 + $0x428] sm:$0xff]
    %v195 = vld [vmem:[#allocation5 + $0x430] sm:$0xff]
    %v196 = vld [vmem:[#allocation5 + $0x438] sm:$0xff]
    %v197 = vld [vmem:[#allocation5 + $0x440] sm:$0xff]
    %v198 = vld [vmem:[#allocation5 + $0x448] sm:$0xff]
    %v199 = vld [vmem:[#allocation5 + $0x450] sm:$0xff]
    %v200 = vld [vmem:[#allocation5 + $0x458] sm:$0xff]
    %v201 = vld [vmem:[#allocation5 + $0x460] sm:$0xff]
    %v202 = vld [vmem:[#allocation5 + $0x468] sm:$0xff]
    %v203 = vld [vmem:[#allocation5 + $0x470] sm:$0xff]
    %v204 = vld [vmem:[#allocation5 + $0x478] sm:$0xff]
    %v205 = vld [vmem:[#allocation5 + $0x480] sm:$0xff]
    %v206 = vld [vmem:[#allocation5 + $0x488] sm:$0xff]
    %v207 = vld [vmem:[#allocation5 + $0x490] sm:$0xff]
    %v208 = vld [vmem:[#allocation5 + $0x498] sm:$0xff]
    %v209 = vld [vmem:[#allocation5 + $0x4a0] sm:$0xff]
    %v210 = vld [vmem:[#allocation5 + $0x4a8] sm:$0xff]
    %v211 = vld [vmem:[#allocation5 + $0x4b0] sm:$0xff]
    %v212 = vld [vmem:[#allocation5 + $0x4b8] sm:$0xff]
    %v213 = vld [vmem:[#allocation5 + $0x4c0] sm:$0xff]
    %v214 = vld [vmem:[#allocation5 + $0x4c8] sm:$0xff]
    %v215 = vld [vmem:[#allocation5 + $0x4d0] sm:$0xff]
    %v216 = vld [vmem:[#allocation5 + $0x4d8] sm:$0xff]
    %v217 = vld [vmem:[#allocation5 + $0x4e0] sm:$0xff]
    %v218 = vld [vmem:[#allocation5 + $0x4e8] sm:$0xff]
    %v219 = vld [vmem:[#allocation5 + $0x4f0] sm:$0xff]
    %v220 = vld [vmem:[#allocation5 + $0x4f8] sm:$0xff]
    %v221 = vld [vmem:[#allocation5 + $0x500] sm:$0xff]
    %v222 = vld [vmem:[#allocation5 + $0x508] sm:$0xff]
    %v223 = vld [vmem:[#allocation5 + $0x510] sm:$0xff]
    %v224 = vld [vmem:[#allocation5 + $0x518] sm:$0xff]
    %v225 = vld [vmem:[#allocation5 + $0x520] sm:$0xff]
    %v226 = vld [vmem:[#allocation5 + $0x528] sm:$0xff]
    %v227 = vld [vmem:[#allocation5 + $0x530] sm:$0xff]
    %v228 = vld [vmem:[#allocation5 + $0x538] sm:$0xff]
    %v229 = vld [vmem:[#allocation5 + $0x540] sm:$0xff]
    %v230 = vld [vmem:[#allocation5 + $0x548] sm:$0xff]
    %v231 = vld [vmem:[#allocation5 + $0x550] sm:$0xff]
    %v232 = vld [vmem:[#allocation5 + $0x558] sm:$0xff]
    %v233 = vld [vmem:[#allocation5 + $0x560] sm:$0xff]
    %v234 = vld [vmem:[#allocation5 + $0x568] sm:$0xff]
    %v235 = vld [vmem:[#allocation5 + $0x570] sm:$0xff]
    %v236 = vld [vmem:[#allocation5 + $0x578] sm:$0xff]
    %v237 = vld [vmem:[#allocation5 + $0x580] sm:$0xff]
    %v238 = vld [vmem:[#allocation5 + $0x588] sm:$0xff]
    %v239 = vld [vmem:[#allocation5 + $0x590] sm:$0xff]
    %v240 = vld [vmem:[#allocation5 + $0x598] sm:$0xff]
    %v241 = vld [vmem:[#allocation5 + $0x5a0] sm:$0xff]
    %v242 = vld [vmem:[#allocation5 + $0x5a8] sm:$0xff]
    %v243 = vld [vmem:[#allocation5 + $0x5b0] sm:$0xff]
    %v244 = vld [vmem:[#allocation5 + $0x5b8] sm:$0xff]
    %v245 = vld [vmem:[#allocation5 + $0x5c0] sm:$0xff]
    %v246 = vld [vmem:[#allocation5 + $0x5c8] sm:$0xff]
    %v247 = vld [vmem:[#allocation5 + $0x5d0] sm:$0xff]
    %v248 = vld [vmem:[#allocation5 + $0x5d8] sm:$0xff]
    %v249 = vld [vmem:[#allocation5 + $0x5e0] sm:$0xff]
    %v250 = vld [vmem:[#allocation5 + $0x5e8] sm:$0xff]
    %v251 = vld [vmem:[#allocation5 + $0x5f0] sm:$0xff]
    %v252 = vld [vmem:[#allocation5 + $0x5f8] sm:$0xff]
    %v253 = vld [vmem:[%s2] sm:$0xf]
    %v255 = vlaneseq
    %v256 = vshrl.u32 %v255, 7
    %v257 = vsub.s32 0, %v256
    %v258 = vrot.slane %v253, %v257
    %v259 = vlaneseq
    %v260 = vshrl.u32 %v259, 7
    %v261 = vsub.s32 1, %v260
    %v262 = vrot.slane %v253, %v261
    %v263 = vlaneseq
    %v264 = vshrl.u32 %v263, 7
    %v265 = vsub.s32 2, %v264
    %v266 = vrot.slane %v253, %v265
    %v267 = vlaneseq
    %v268 = vshrl.u32 %v267, 7
    %v269 = vsub.s32 3, %v268
    %v270 = vrot.slane %v253, %v269
    %v467 = vunpack.c.l.b16 %v61
    %v468 = vunpack.c.h.b16 %v61
    %v469 = vunpack.c.l.b16 %v62
    %v470 = vunpack.c.h.b16 %v62
    %v471 = vunpack.c.l.b16 %v63
    %v472 = vunpack.c.h.b16 %v63
    %v473 = vunpack.c.l.b16 %v64
    %v474 = vunpack.c.h.b16 %v64
    %v475 = vunpack.c.l.b16 %v65
    %v476 = vunpack.c.h.b16 %v65
    %v477 = vunpack.c.l.b16 %v66
    %v478 = vunpack.c.h.b16 %v66
    %v479 = vunpack.c.l.b16 %v67
    %v480 = vunpack.c.h.b16 %v67
    %v481 = vunpack.c.l.b16 %v68
    %v482 = vunpack.c.h.b16 %v68
    %v483 = vunpack.c.l.b16 %v69
    %v484 = vunpack.c.h.b16 %v69
    %v485 = vunpack.c.l.b16 %v70
    %v486 = vunpack.c.h.b16 %v70
    %v487 = vunpack.c.l.b16 %v71
    %v488 = vunpack.c.h.b16 %v71
    %v489 = vunpack.c.l.b16 %v72
    %v490 = vunpack.c.h.b16 %v72
    %v491 = vunpack.c.l.b16 %v73
    %v492 = vunpack.c.h.b16 %v73
    %v493 = vunpack.c.l.b16 %v74
    %v494 = vunpack.c.h.b16 %v74
    %v495 = vunpack.c.l.b16 %v75
    %v496 = vunpack.c.h.b16 %v75
    %v497 = vunpack.c.l.b16 %v76
    %v498 = vunpack.c.h.b16 %v76
    %v499 = vunpack.c.l.b16 %v77
    %v500 = vunpack.c.h.b16 %v77
    %v501 = vunpack.c.l.b16 %v78
    %v502 = vunpack.c.h.b16 %v78
    %v503 = vunpack.c.l.b16 %v79
    %v504 = vunpack.c.h.b16 %v79
    %v505 = vunpack.c.l.b16 %v80
    %v506 = vunpack.c.h.b16 %v80
    %v507 = vunpack.c.l.b16 %v81
    %v508 = vunpack.c.h.b16 %v81
    %v509 = vunpack.c.l.b16 %v82
    %v510 = vunpack.c.h.b16 %v82
    %v511 = vunpack.c.l.b16 %v83
    %v512 = vunpack.c.h.b16 %v83
    %v513 = vunpack.c.l.b16 %v84
    %v514 = vunpack.c.h.b16 %v84
    %v515 = vunpack.c.l.b16 %v85
    %v516 = vunpack.c.h.b16 %v85
    %v517 = vunpack.c.l.b16 %v86
    %v518 = vunpack.c.h.b16 %v86
    %v519 = vunpack.c.l.b16 %v87
    %v520 = vunpack.c.h.b16 %v87
    %v521 = vunpack.c.l.b16 %v88
    %v522 = vunpack.c.h.b16 %v88
    %v523 = vunpack.c.l.b16 %v89
    %v524 = vunpack.c.h.b16 %v89
    %v525 = vunpack.c.l.b16 %v90
    %v526 = vunpack.c.h.b16 %v90
    %v527 = vunpack.c.l.b16 %v91
    %v528 = vunpack.c.h.b16 %v91
    %v529 = vunpack.c.l.b16 %v92
    %v530 = vunpack.c.h.b16 %v92
    %v531 = vunpack.c.l.b16 %v93
    %v532 = vunpack.c.h.b16 %v93
    %v533 = vunpack.c.l.b16 %v94
    %v534 = vunpack.c.h.b16 %v94
    %v535 = vunpack.c.l.b16 %v95
    %v536 = vunpack.c.h.b16 %v95
    %v537 = vunpack.c.l.b16 %v96
    %v538 = vunpack.c.h.b16 %v96
    %v539 = vunpack.c.l.b16 %v97
    %v540 = vunpack.c.h.b16 %v97
    %v541 = vunpack.c.l.b16 %v98
    %v542 = vunpack.c.h.b16 %v98
    %v543 = vunpack.c.l.b16 %v99
    %v544 = vunpack.c.h.b16 %v99
    %v545 = vunpack.c.l.b16 %v100
    %v546 = vunpack.c.h.b16 %v100
    %v547 = vunpack.c.l.b16 %v101
    %v548 = vunpack.c.h.b16 %v101
    %v549 = vunpack.c.l.b16 %v102
    %v550 = vunpack.c.h.b16 %v102
    %v551 = vunpack.c.l.b16 %v103
    %v552 = vunpack.c.h.b16 %v103
    %v553 = vunpack.c.l.b16 %v104
    %v554 = vunpack.c.h.b16 %v104
    %v555 = vunpack.c.l.b16 %v105
    %v556 = vunpack.c.h.b16 %v105
    %v557 = vunpack.c.l.b16 %v106
    %v558 = vunpack.c.h.b16 %v106
    %v559 = vunpack.c.l.b16 %v107
    %v560 = vunpack.c.h.b16 %v107
    %v561 = vunpack.c.l.b16 %v108
    %v562 = vunpack.c.h.b16 %v108
    %v563 = vunpack.c.l.b16 %v109
    %v564 = vunpack.c.h.b16 %v109
    %v565 = vunpack.c.l.b16 %v110
    %v566 = vunpack.c.h.b16 %v110
    %v567 = vunpack.c.l.b16 %v111
    %v568 = vunpack.c.h.b16 %v111
    %v569 = vunpack.c.l.b16 %v112
    %v570 = vunpack.c.h.b16 %v112
    %v571 = vunpack.c.l.b16 %v113
    %v572 = vunpack.c.h.b16 %v113
    %v573 = vunpack.c.l.b16 %v114
    %v574 = vunpack.c.h.b16 %v114
    %v575 = vunpack.c.l.b16 %v115
    %v576 = vunpack.c.h.b16 %v115
    %v577 = vunpack.c.l.b16 %v116
    %v578 = vunpack.c.h.b16 %v116
    %v579 = vunpack.c.l.b16 %v117
    %v580 = vunpack.c.h.b16 %v117
    %v581 = vunpack.c.l.b16 %v118
    %v582 = vunpack.c.h.b16 %v118
    %v583 = vunpack.c.l.b16 %v119
    %v584 = vunpack.c.h.b16 %v119
    %v585 = vunpack.c.l.b16 %v120
    %v586 = vunpack.c.h.b16 %v120
    %v587 = vunpack.c.l.b16 %v121
    %v588 = vunpack.c.h.b16 %v121
    %v589 = vunpack.c.l.b16 %v122
    %v590 = vunpack.c.h.b16 %v122
    %v591 = vunpack.c.l.b16 %v123
    %v592 = vunpack.c.h.b16 %v123
    %v593 = vunpack.c.l.b16 %v124
    %v594 = vunpack.c.h.b16 %v124
    %v595 = vunpack.c.l.b16 %v125
    %v596 = vunpack.c.h.b16 %v125
    %v597 = vunpack.c.l.b16 %v126
    %v598 = vunpack.c.h.b16 %v126
    %v599 = vunpack.c.l.b16 %v127
    %v600 = vunpack.c.h.b16 %v127
    %v601 = vunpack.c.l.b16 %v128
    %v602 = vunpack.c.h.b16 %v128
    %v603 = vunpack.c.l.b16 %v129
    %v604 = vunpack.c.h.b16 %v129
    %v605 = vunpack.c.l.b16 %v130
    %v606 = vunpack.c.h.b16 %v130
    %v607 = vunpack.c.l.b16 %v131
    %v608 = vunpack.c.h.b16 %v131
    %v609 = vunpack.c.l.b16 %v132
    %v610 = vunpack.c.h.b16 %v132
    %v611 = vunpack.c.l.b16 %v133
    %v612 = vunpack.c.h.b16 %v133
    %v613 = vunpack.c.l.b16 %v134
    %v614 = vunpack.c.h.b16 %v134
    %v615 = vunpack.c.l.b16 %v135
    %v616 = vunpack.c.h.b16 %v135
    %v617 = vunpack.c.l.b16 %v136
    %v618 = vunpack.c.h.b16 %v136
    %v619 = vunpack.c.l.b16 %v137
    %v620 = vunpack.c.h.b16 %v137
    %v621 = vunpack.c.l.b16 %v138
    %v622 = vunpack.c.h.b16 %v138
    %v623 = vunpack.c.l.b16 %v139
    %v624 = vunpack.c.h.b16 %v139
    %v625 = vunpack.c.l.b16 %v140
    %v626 = vunpack.c.h.b16 %v140
    %v627 = vunpack.c.l.b16 %v141
    %v628 = vunpack.c.h.b16 %v141
    %v629 = vunpack.c.l.b16 %v142
    %v630 = vunpack.c.h.b16 %v142
    %v631 = vunpack.c.l.b16 %v143
    %v632 = vunpack.c.h.b16 %v143
    %v633 = vunpack.c.l.b16 %v144
    %v634 = vunpack.c.h.b16 %v144
    %v635 = vunpack.c.l.b16 %v145
    %v636 = vunpack.c.h.b16 %v145
    %v637 = vunpack.c.l.b16 %v146
    %v638 = vunpack.c.h.b16 %v146
    %v639 = vunpack.c.l.b16 %v147
    %v640 = vunpack.c.h.b16 %v147
    %v641 = vunpack.c.l.b16 %v148
    %v642 = vunpack.c.h.b16 %v148
    %v643 = vunpack.c.l.b16 %v149
    %v644 = vunpack.c.h.b16 %v149
    %v645 = vunpack.c.l.b16 %v150
    %v646 = vunpack.c.h.b16 %v150
    %v647 = vunpack.c.l.b16 %v151
    %v648 = vunpack.c.h.b16 %v151
    %v649 = vunpack.c.l.b16 %v152
    %v650 = vunpack.c.h.b16 %v152
    %v651 = vunpack.c.l.b16 %v153
    %v652 = vunpack.c.h.b16 %v153
    %v653 = vunpack.c.l.b16 %v154
    %v654 = vunpack.c.h.b16 %v154
    %v655 = vunpack.c.l.b16 %v155
    %v656 = vunpack.c.h.b16 %v155
    %v657 = vunpack.c.l.b16 %v156
    %v658 = vunpack.c.h.b16 %v156
    %v659 = vunpack.c.l.b16 %v157
    %v660 = vunpack.c.h.b16 %v157
    %v661 = vunpack.c.l.b16 %v158
    %v662 = vunpack.c.h.b16 %v158
    %v663 = vunpack.c.l.b16 %v159
    %v664 = vunpack.c.h.b16 %v159
    %v665 = vunpack.c.l.b16 %v160
    %v666 = vunpack.c.h.b16 %v160
    %v667 = vunpack.c.l.b16 %v161
    %v668 = vunpack.c.h.b16 %v161
    %v669 = vunpack.c.l.b16 %v162
    %v670 = vunpack.c.h.b16 %v162
    %v671 = vunpack.c.l.b16 %v163
    %v672 = vunpack.c.h.b16 %v163
    %v673 = vunpack.c.l.b16 %v164
    %v674 = vunpack.c.h.b16 %v164
    %v675 = vunpack.c.l.b16 %v165
    %v676 = vunpack.c.h.b16 %v165
    %v677 = vunpack.c.l.b16 %v166
    %v678 = vunpack.c.h.b16 %v166
    %v679 = vunpack.c.l.b16 %v167
    %v680 = vunpack.c.h.b16 %v167
    %v681 = vunpack.c.l.b16 %v168
    %v682 = vunpack.c.h.b16 %v168
    %v683 = vunpack.c.l.b16 %v169
    %v684 = vunpack.c.h.b16 %v169
    %v685 = vunpack.c.l.b16 %v170
    %v686 = vunpack.c.h.b16 %v170
    %v687 = vunpack.c.l.b16 %v171
    %v688 = vunpack.c.h.b16 %v171
    %v689 = vunpack.c.l.b16 %v172
    %v690 = vunpack.c.h.b16 %v172
    %v691 = vunpack.c.l.b16 %v173
    %v692 = vunpack.c.h.b16 %v173
    %v693 = vunpack.c.l.b16 %v174
    %v694 = vunpack.c.h.b16 %v174
    %v695 = vunpack.c.l.b16 %v175
    %v696 = vunpack.c.h.b16 %v175
    %v697 = vunpack.c.l.b16 %v176
    %v698 = vunpack.c.h.b16 %v176
    %v699 = vunpack.c.l.b16 %v177
    %v700 = vunpack.c.h.b16 %v177
    %v701 = vunpack.c.l.b16 %v178
    %v702 = vunpack.c.h.b16 %v178
    %v703 = vunpack.c.l.b16 %v179
    %v704 = vunpack.c.h.b16 %v179
    %v705 = vunpack.c.l.b16 %v180
    %v706 = vunpack.c.h.b16 %v180
    %v707 = vunpack.c.l.b16 %v181
    %v708 = vunpack.c.h.b16 %v181
    %v709 = vunpack.c.l.b16 %v182
    %v710 = vunpack.c.h.b16 %v182
    %v711 = vunpack.c.l.b16 %v183
    %v712 = vunpack.c.h.b16 %v183
    %v713 = vunpack.c.l.b16 %v184
    %v714 = vunpack.c.h.b16 %v184
    %v715 = vunpack.c.l.b16 %v185
    %v716 = vunpack.c.h.b16 %v185
    %v717 = vunpack.c.l.b16 %v186
    %v718 = vunpack.c.h.b16 %v186
    %v719 = vunpack.c.l.b16 %v187
    %v720 = vunpack.c.h.b16 %v187
    %v721 = vunpack.c.l.b16 %v188
    %v722 = vunpack.c.h.b16 %v188
    %v723 = vunpack.c.l.b16 %v189
    %v724 = vunpack.c.h.b16 %v189
    %v725 = vunpack.c.l.b16 %v190
    %v726 = vunpack.c.h.b16 %v190
    %v727 = vunpack.c.l.b16 %v191
    %v728 = vunpack.c.h.b16 %v191
    %v729 = vunpack.c.l.b16 %v192
    %v730 = vunpack.c.h.b16 %v192
    %v731 = vunpack.c.l.b16 %v193
    %v732 = vunpack.c.h.b16 %v193
    %v733 = vunpack.c.l.b16 %v194
    %v734 = vunpack.c.h.b16 %v194
    %v735 = vunpack.c.l.b16 %v195
    %v736 = vunpack.c.h.b16 %v195
    %v737 = vunpack.c.l.b16 %v196
    %v738 = vunpack.c.h.b16 %v196
    %v739 = vunpack.c.l.b16 %v197
    %v740 = vunpack.c.h.b16 %v197
    %v741 = vunpack.c.l.b16 %v198
    %v742 = vunpack.c.h.b16 %v198
    %v743 = vunpack.c.l.b16 %v199
    %v744 = vunpack.c.h.b16 %v199
    %v745 = vunpack.c.l.b16 %v200
    %v746 = vunpack.c.h.b16 %v200
    %v747 = vunpack.c.l.b16 %v201
    %v748 = vunpack.c.h.b16 %v201
    %v749 = vunpack.c.l.b16 %v202
    %v750 = vunpack.c.h.b16 %v202
    %v751 = vunpack.c.l.b16 %v203
    %v752 = vunpack.c.h.b16 %v203
    %v753 = vunpack.c.l.b16 %v204
    %v754 = vunpack.c.h.b16 %v204
    %v755 = vunpack.c.l.b16 %v205
    %v756 = vunpack.c.h.b16 %v205
    %v757 = vunpack.c.l.b16 %v206
    %v758 = vunpack.c.h.b16 %v206
    %v759 = vunpack.c.l.b16 %v207
    %v760 = vunpack.c.h.b16 %v207
    %v761 = vunpack.c.l.b16 %v208
    %v762 = vunpack.c.h.b16 %v208
    %v763 = vunpack.c.l.b16 %v209
    %v764 = vunpack.c.h.b16 %v209
    %v765 = vunpack.c.l.b16 %v210
    %v766 = vunpack.c.h.b16 %v210
    %v767 = vunpack.c.l.b16 %v211
    %v768 = vunpack.c.h.b16 %v211
    %v769 = vunpack.c.l.b16 %v212
    %v770 = vunpack.c.h.b16 %v212
    %v771 = vunpack.c.l.b16 %v213
    %v772 = vunpack.c.h.b16 %v213
    %v773 = vunpack.c.l.b16 %v214
    %v774 = vunpack.c.h.b16 %v214
    %v775 = vunpack.c.l.b16 %v215
    %v776 = vunpack.c.h.b16 %v215
    %v777 = vunpack.c.l.b16 %v216
    %v778 = vunpack.c.h.b16 %v216
    %v779 = vunpack.c.l.b16 %v217
    %v780 = vunpack.c.h.b16 %v217
    %v781 = vunpack.c.l.b16 %v218
    %v782 = vunpack.c.h.b16 %v218
    %v783 = vunpack.c.l.b16 %v219
    %v784 = vunpack.c.h.b16 %v219
    %v785 = vunpack.c.l.b16 %v220
    %v786 = vunpack.c.h.b16 %v220
    %v787 = vunpack.c.l.b16 %v221
    %v788 = vunpack.c.h.b16 %v221
    %v789 = vunpack.c.l.b16 %v222
    %v790 = vunpack.c.h.b16 %v222
    %v791 = vunpack.c.l.b16 %v223
    %v792 = vunpack.c.h.b16 %v223
    %v793 = vunpack.c.l.b16 %v224
    %v794 = vunpack.c.h.b16 %v224
    %v795 = vunpack.c.l.b16 %v225
    %v796 = vunpack.c.h.b16 %v225
    %v797 = vunpack.c.l.b16 %v226
    %v798 = vunpack.c.h.b16 %v226
    %v799 = vunpack.c.l.b16 %v227
    %v800 = vunpack.c.h.b16 %v227
    %v801 = vunpack.c.l.b16 %v228
    %v802 = vunpack.c.h.b16 %v228
    %v803 = vunpack.c.l.b16 %v229
    %v804 = vunpack.c.h.b16 %v229
    %v805 = vunpack.c.l.b16 %v230
    %v806 = vunpack.c.h.b16 %v230
    %v807 = vunpack.c.l.b16 %v231
    %v808 = vunpack.c.h.b16 %v231
    %v809 = vunpack.c.l.b16 %v232
    %v810 = vunpack.c.h.b16 %v232
    %v811 = vunpack.c.l.b16 %v233
    %v812 = vunpack.c.h.b16 %v233
    %v813 = vunpack.c.l.b16 %v234
    %v814 = vunpack.c.h.b16 %v234
    %v815 = vunpack.c.l.b16 %v235
    %v816 = vunpack.c.h.b16 %v235
    %v817 = vunpack.c.l.b16 %v236
    %v818 = vunpack.c.h.b16 %v236
    %v819 = vunpack.c.l.b16 %v237
    %v820 = vunpack.c.h.b16 %v237
    %v821 = vunpack.c.l.b16 %v238
    %v822 = vunpack.c.h.b16 %v238
    %v823 = vunpack.c.l.b16 %v239
    %v824 = vunpack.c.h.b16 %v239
    %v825 = vunpack.c.l.b16 %v240
    %v826 = vunpack.c.h.b16 %v240
    %v827 = vunpack.c.l.b16 %v241
    %v828 = vunpack.c.h.b16 %v241
    %v829 = vunpack.c.l.b16 %v242
    %v830 = vunpack.c.h.b16 %v242
    %v831 = vunpack.c.l.b16 %v243
    %v832 = vunpack.c.h.b16 %v243
    %v833 = vunpack.c.l.b16 %v244
    %v834 = vunpack.c.h.b16 %v244
    %v835 = vunpack.c.l.b16 %v245
    %v836 = vunpack.c.h.b16 %v245
    %v837 = vunpack.c.l.b16 %v246
    %v838 = vunpack.c.h.b16 %v246
    %v839 = vunpack.c.l.b16 %v247
    %v840 = vunpack.c.h.b16 %v247
    %v841 = vunpack.c.l.b16 %v248
    %v842 = vunpack.c.h.b16 %v248
    %v843 = vunpack.c.l.b16 %v249
    %v844 = vunpack.c.h.b16 %v249
    %v845 = vunpack.c.l.b16 %v250
    %v846 = vunpack.c.h.b16 %v250
    %v847 = vunpack.c.l.b16 %v251
    %v848 = vunpack.c.h.b16 %v251
    %v849 = vunpack.c.l.b16 %v252
    %v850 = vunpack.c.h.b16 %v252
    %v851 = vpack.c.b16 %v473, %v467
    %v852 = vpack.c.b16 %v474, %v468
    %v853 = vpack.c.b16 %v475, %v469
    %v854 = vpack.c.b16 %v476, %v470
    %v855 = vpack.c.b16 %v477, %v471
    %v856 = vpack.c.b16 %v478, %v472
    %v857 = vpack.c.b16 %v485, %v479
    %v858 = vpack.c.b16 %v486, %v480
    %v859 = vpack.c.b16 %v487, %v481
    %v860 = vpack.c.b16 %v488, %v482
    %v861 = vpack.c.b16 %v489, %v483
    %v862 = vpack.c.b16 %v490, %v484
    %v863 = vpack.c.b16 %v497, %v491
    %v864 = vpack.c.b16 %v498, %v492
    %v865 = vpack.c.b16 %v499, %v493
    %v866 = vpack.c.b16 %v500, %v494
    %v867 = vpack.c.b16 %v501, %v495
    %v868 = vpack.c.b16 %v502, %v496
    %v869 = vpack.c.b16 %v509, %v503
    %v870 = vpack.c.b16 %v510, %v504
    %v871 = vpack.c.b16 %v511, %v505
    %v872 = vpack.c.b16 %v512, %v506
    %v873 = vpack.c.b16 %v513, %v507
    %v874 = vpack.c.b16 %v514, %v508
    %v875 = vpack.c.b16 %v521, %v515
    %v876 = vpack.c.b16 %v522, %v516
    %v877 = vpack.c.b16 %v523, %v517
    %v878 = vpack.c.b16 %v524, %v518
    %v879 = vpack.c.b16 %v525, %v519
    %v880 = vpack.c.b16 %v526, %v520
    %v881 = vpack.c.b16 %v533, %v527
    %v882 = vpack.c.b16 %v534, %v528
    %v883 = vpack.c.b16 %v535, %v529
    %v884 = vpack.c.b16 %v536, %v530
    %v885 = vpack.c.b16 %v537, %v531
    %v886 = vpack.c.b16 %v538, %v532
    %v887 = vpack.c.b16 %v545, %v539
    %v888 = vpack.c.b16 %v546, %v540
    %v889 = vpack.c.b16 %v547, %v541
    %v890 = vpack.c.b16 %v548, %v542
    %v891 = vpack.c.b16 %v549, %v543
    %v892 = vpack.c.b16 %v550, %v544
    %v893 = vpack.c.b16 %v557, %v551
    %v894 = vpack.c.b16 %v558, %v552
    %v895 = vpack.c.b16 %v559, %v553
    %v896 = vpack.c.b16 %v560, %v554
    %v897 = vpack.c.b16 %v561, %v555
    %v898 = vpack.c.b16 %v562, %v556
    %v899 = vpack.c.b16 %v569, %v563
    %v900 = vpack.c.b16 %v570, %v564
    %v901 = vpack.c.b16 %v571, %v565
    %v902 = vpack.c.b16 %v572, %v566
    %v903 = vpack.c.b16 %v573, %v567
    %v904 = vpack.c.b16 %v574, %v568
    %v905 = vpack.c.b16 %v581, %v575
    %v906 = vpack.c.b16 %v582, %v576
    %v907 = vpack.c.b16 %v583, %v577
    %v908 = vpack.c.b16 %v584, %v578
    %v909 = vpack.c.b16 %v585, %v579
    %v910 = vpack.c.b16 %v586, %v580
    %v911 = vpack.c.b16 %v593, %v587
    %v912 = vpack.c.b16 %v594, %v588
    %v913 = vpack.c.b16 %v595, %v589
    %v914 = vpack.c.b16 %v596, %v590
    %v915 = vpack.c.b16 %v597, %v591
    %v916 = vpack.c.b16 %v598, %v592
    %v917 = vpack.c.b16 %v605, %v599
    %v918 = vpack.c.b16 %v606, %v600
    %v919 = vpack.c.b16 %v607, %v601
    %v920 = vpack.c.b16 %v608, %v602
    %v921 = vpack.c.b16 %v609, %v603
    %v922 = vpack.c.b16 %v610, %v604
    %v923 = vpack.c.b16 %v617, %v611
    %v924 = vpack.c.b16 %v618, %v612
    %v925 = vpack.c.b16 %v619, %v613
    %v926 = vpack.c.b16 %v620, %v614
    %v927 = vpack.c.b16 %v621, %v615
    %v928 = vpack.c.b16 %v622, %v616
    %v929 = vpack.c.b16 %v629, %v623
    %v930 = vpack.c.b16 %v630, %v624
    %v931 = vpack.c.b16 %v631, %v625
    %v932 = vpack.c.b16 %v632, %v626
    %v933 = vpack.c.b16 %v633, %v627
    %v934 = vpack.c.b16 %v634, %v628
    %v935 = vpack.c.b16 %v641, %v635
    %v936 = vpack.c.b16 %v642, %v636
    %v937 = vpack.c.b16 %v643, %v637
    %v938 = vpack.c.b16 %v644, %v638
    %v939 = vpack.c.b16 %v645, %v639
    %v940 = vpack.c.b16 %v646, %v640
    %v941 = vpack.c.b16 %v653, %v647
    %v942 = vpack.c.b16 %v654, %v648
    %v943 = vpack.c.b16 %v655, %v649
    %v944 = vpack.c.b16 %v656, %v650
    %v945 = vpack.c.b16 %v657, %v651
    %v946 = vpack.c.b16 %v658, %v652
    %v947 = vpack.c.b16 %v665, %v659
    %v948 = vpack.c.b16 %v666, %v660
    %v949 = vpack.c.b16 %v667, %v661
    %v950 = vpack.c.b16 %v668, %v662
    %v951 = vpack.c.b16 %v669, %v663
    %v952 = vpack.c.b16 %v670, %v664
    %v953 = vpack.c.b16 %v677, %v671
    %v954 = vpack.c.b16 %v678, %v672
    %v955 = vpack.c.b16 %v679, %v673
    %v956 = vpack.c.b16 %v680, %v674
    %v957 = vpack.c.b16 %v681, %v675
    %v958 = vpack.c.b16 %v682, %v676
    %v959 = vpack.c.b16 %v689, %v683
    %v960 = vpack.c.b16 %v690, %v684
    %v961 = vpack.c.b16 %v691, %v685
    %v962 = vpack.c.b16 %v692, %v686
    %v963 = vpack.c.b16 %v693, %v687
    %v964 = vpack.c.b16 %v694, %v688
    %v965 = vpack.c.b16 %v701, %v695
    %v966 = vpack.c.b16 %v702, %v696
    %v967 = vpack.c.b16 %v703, %v697
    %v968 = vpack.c.b16 %v704, %v698
    %v969 = vpack.c.b16 %v705, %v699
    %v970 = vpack.c.b16 %v706, %v700
    %v971 = vpack.c.b16 %v713, %v707
    %v972 = vpack.c.b16 %v714, %v708
    %v973 = vpack.c.b16 %v715, %v709
    %v974 = vpack.c.b16 %v716, %v710
    %v975 = vpack.c.b16 %v717, %v711
    %v976 = vpack.c.b16 %v718, %v712
    %v977 = vpack.c.b16 %v725, %v719
    %v978 = vpack.c.b16 %v726, %v720
    %v979 = vpack.c.b16 %v727, %v721
    %v980 = vpack.c.b16 %v728, %v722
    %v981 = vpack.c.b16 %v729, %v723
    %v982 = vpack.c.b16 %v730, %v724
    %v983 = vpack.c.b16 %v737, %v731
    %v984 = vpack.c.b16 %v738, %v732
    %v985 = vpack.c.b16 %v739, %v733
    %v986 = vpack.c.b16 %v740, %v734
    %v987 = vpack.c.b16 %v741, %v735
    %v988 = vpack.c.b16 %v742, %v736
    %v989 = vpack.c.b16 %v749, %v743
    %v990 = vpack.c.b16 %v750, %v744
    %v991 = vpack.c.b16 %v751, %v745
    %v992 = vpack.c.b16 %v752, %v746
    %v993 = vpack.c.b16 %v753, %v747
    %v994 = vpack.c.b16 %v754, %v748
    %v995 = vpack.c.b16 %v761, %v755
    %v996 = vpack.c.b16 %v762, %v756
    %v997 = vpack.c.b16 %v763, %v757
    %v998 = vpack.c.b16 %v764, %v758
    %v999 = vpack.c.b16 %v765, %v759
    %v1000 = vpack.c.b16 %v766, %v760
    %v1001 = vpack.c.b16 %v773, %v767
    %v1002 = vpack.c.b16 %v774, %v768
    %v1003 = vpack.c.b16 %v775, %v769
    %v1004 = vpack.c.b16 %v776, %v770
    %v1005 = vpack.c.b16 %v777, %v771
    %v1006 = vpack.c.b16 %v778, %v772
    %v1007 = vpack.c.b16 %v785, %v779
    %v1008 = vpack.c.b16 %v786, %v780
    %v1009 = vpack.c.b16 %v787, %v781
    %v1010 = vpack.c.b16 %v788, %v782
    %v1011 = vpack.c.b16 %v789, %v783
    %v1012 = vpack.c.b16 %v790, %v784
    %v1013 = vpack.c.b16 %v797, %v791
    %v1014 = vpack.c.b16 %v798, %v792
    %v1015 = vpack.c.b16 %v799, %v793
    %v1016 = vpack.c.b16 %v800, %v794
    %v1017 = vpack.c.b16 %v801, %v795
    %v1018 = vpack.c.b16 %v802, %v796
    %v1019 = vpack.c.b16 %v809, %v803
    %v1020 = vpack.c.b16 %v810, %v804
    %v1021 = vpack.c.b16 %v811, %v805
    %v1022 = vpack.c.b16 %v812, %v806
    %v1023 = vpack.c.b16 %v813, %v807
    %v1024 = vpack.c.b16 %v814, %v808
    %v1025 = vpack.c.b16 %v821, %v815
    %v1026 = vpack.c.b16 %v822, %v816
    %v1027 = vpack.c.b16 %v823, %v817
    %v1028 = vpack.c.b16 %v824, %v818
    %v1029 = vpack.c.b16 %v825, %v819
    %v1030 = vpack.c.b16 %v826, %v820
    %v1031 = vpack.c.b16 %v833, %v827
    %v1032 = vpack.c.b16 %v834, %v828
    %v1033 = vpack.c.b16 %v835, %v829
    %v1034 = vpack.c.b16 %v836, %v830
    %v1035 = vpack.c.b16 %v837, %v831
    %v1036 = vpack.c.b16 %v838, %v832
    %v1037 = vpack.c.b16 %v845, %v839
    %v1038 = vpack.c.b16 %v846, %v840
    %v1039 = vpack.c.b16 %v847, %v841
    %v1040 = vpack.c.b16 %v848, %v842
    %v1041 = vpack.c.b16 %v849, %v843
    %v1042 = vpack.c.b16 %v850, %v844
    %1235 = vmatprep.subr.bf16.mxu0 %v852
    %1236 = vmatpush1.bf16.xpose.msra.mxu0 %v851
    %1237 = vmatprep.subr.bf16.mxu0 %v858
    %1238 = vmatpush1.bf16.xpose.msra.mxu0 %v857
    %1239 = vmatprep.subr.bf16.mxu0 %v864
    %1240 = vmatpush1.bf16.xpose.msra.mxu0 %v863
    %1241 = vmatprep.subr.bf16.mxu0 %v870
    %1242 = vmatpush1.bf16.xpose.msra.mxu0 %v869
    %1243 = vmatprep.subr.bf16.mxu0 %v876
    %1244 = vmatpush1.bf16.xpose.msra.mxu0 %v875
    %1245 = vmatprep.subr.bf16.mxu0 %v882
    %1246 = vmatpush1.bf16.xpose.msra.mxu0 %v881
    %1247 = vmatprep.subr.bf16.mxu0 %v888
    %1248 = vmatpush1.bf16.xpose.msra.mxu0 %v887
    %1249 = vmatprep.subr.bf16.mxu0 %v894
    %1250 = vmatpush1.bf16.xpose.msra.mxu0 %v893
    %1251 = vmatprep.subr.bf16.mxu0 %v900
    %1252 = vmatpush1.bf16.xpose.msra.mxu0 %v899
    %1253 = vmatprep.subr.bf16.mxu0 %v906
    %1254 = vmatpush1.bf16.xpose.msra.mxu0 %v905
    %1255 = vmatprep.subr.bf16.mxu0 %v912
    %1256 = vmatpush1.bf16.xpose.msra.mxu0 %v911
    %1257 = vmatprep.subr.bf16.mxu0 %v918
    %1258 = vmatpush1.bf16.xpose.msra.mxu0 %v917
    %1259 = vmatprep.subr.bf16.mxu0 %v924
    %1260 = vmatpush1.bf16.xpose.msra.mxu0 %v923
    %1261 = vmatprep.subr.bf16.mxu0 %v930
    %1262 = vmatpush1.bf16.xpose.msra.mxu0 %v929
    %1263 = vmatprep.subr.bf16.mxu0 %v936
    %1264 = vmatpush1.bf16.xpose.msra.mxu0 %v935
    %1265 = vmatprep.subr.bf16.mxu0 %v942
    %1266 = vmatpush1.bf16.xpose.msra.mxu0 %v941
    %1267 = vmatprep.mubr.bf16.mxu0 %v56
    %1268 = vmatmul.mubr.bf16.gmra.mrb[0].mxu0 %v55
    %v1269 = vpop.f32.mrb[0].mxu0
    %v1270 = vadd.f32 %v258, %v1269
    %v1271 = vpop.f32.mrb[0].mxu0
    %v1272 = vadd.f32 %v262, %v1271
    %v1273 = vpop.f32.mrb[0].mxu0
    %v1274 = vadd.f32 %v258, %v1273
    %v1275 = vpop.f32.mrb[0].mxu0
    %v1276 = vadd.f32 %v262, %v1275
    %1277 = vdwg.mxu0
    %1278 = vmatprep.subr.bf16.mxu0 %v854
    %1279 = vmatpush1.bf16.xpose.msra.mxu0 %v853
    %1280 = vmatprep.subr.bf16.mxu0 %v860
    %1281 = vmatpush1.bf16.xpose.msra.mxu0 %v859
    %1282 = vmatprep.subr.bf16.mxu0 %v866
    %1283 = vmatpush1.bf16.xpose.msra.mxu0 %v865
    %1284 = vmatprep.subr.bf16.mxu0 %v872
    %1285 = vmatpush1.bf16.xpose.msra.mxu0 %v871
    %1286 = vmatprep.subr.bf16.mxu0 %v878
    %1287 = vmatpush1.bf16.xpose.msra.mxu0 %v877
    %1288 = vmatprep.subr.bf16.mxu0 %v884
    %1289 = vmatpush1.bf16.xpose.msra.mxu0 %v883
    %1290 = vmatprep.subr.bf16.mxu0 %v890
    %1291 = vmatpush1.bf16.xpose.msra.mxu0 %v889
    %1292 = vmatprep.subr.bf16.mxu0 %v896
    %1293 = vmatpush1.bf16.xpose.msra.mxu0 %v895
    %1294 = vmatprep.subr.bf16.mxu0 %v902
    %1295 = vmatpush1.bf16.xpose.msra.mxu0 %v901
    %1296 = vmatprep.subr.bf16.mxu0 %v908
    %1297 = vmatpush1.bf16.xpose.msra.mxu0 %v907
    %1298 = vmatprep.subr.bf16.mxu0 %v914
    %1299 = vmatpush1.bf16.xpose.msra.mxu0 %v913
    %1300 = vmatprep.subr.bf16.mxu0 %v920
    %1301 = vmatpush1.bf16.xpose.msra.mxu0 %v919
    %1302 = vmatprep.subr.bf16.mxu0 %v926
    %1303 = vmatpush1.bf16.xpose.msra.mxu0 %v925
    %1304 = vmatprep.subr.bf16.mxu0 %v932
    %1305 = vmatpush1.bf16.xpose.msra.mxu0 %v931
    %1306 = vmatprep.subr.bf16.mxu0 %v938
    %1307 = vmatpush1.bf16.xpose.msra.mxu0 %v937
    %1308 = vmatprep.subr.bf16.mxu0 %v944
    %1309 = vmatpush1.bf16.xpose.msra.mxu0 %v943
    %1310 = vmatprep.mubr.bf16.mxu0 %v58
    %1311 = vmatmul.mubr.bf16.gmra.mrb[0].mxu0 %v57
    %v1312 = vpop.f32.mrb[0].mxu0
    %v1313 = vadd.f32 %v1270, %v1312
    %v1314 = vpop.f32.mrb[0].mxu0
    %v1315 = vadd.f32 %v1272, %v1314
    %v1316 = vpop.f32.mrb[0].mxu0
    %v1317 = vadd.f32 %v1274, %v1316
    %v1318 = vpop.f32.mrb[0].mxu0
    %v1319 = vadd.f32 %v1276, %v1318
    %1320 = vdwg.mxu0
    %1321 = vmatprep.subr.bf16.mxu0 %v856
    %1322 = vmatpush1.bf16.xpose.msra.mxu0 %v855
    %1323 = vmatprep.subr.bf16.mxu0 %v862
    %1324 = vmatpush1.bf16.xpose.msra.mxu0 %v861
    %1325 = vmatprep.subr.bf16.mxu0 %v868
    %1326 = vmatpush1.bf16.xpose.msra.mxu0 %v867
    %1327 = vmatprep.subr.bf16.mxu0 %v874
    %1328 = vmatpush1.bf16.xpose.msra.mxu0 %v873
    %1329 = vmatprep.subr.bf16.mxu0 %v880
    %1330 = vmatpush1.bf16.xpose.msra.mxu0 %v879
    %1331 = vmatprep.subr.bf16.mxu0 %v886
    %1332 = vmatpush1.bf16.xpose.msra.mxu0 %v885
    %1333 = vmatprep.subr.bf16.mxu0 %v892
    %1334 = vmatpush1.bf16.xpose.msra.mxu0 %v891
    %1335 = vmatprep.subr.bf16.mxu0 %v898
    %1336 = vmatpush1.bf16.xpose.msra.mxu0 %v897
    %1337 = vmatprep.subr.bf16.mxu0 %v904
    %1338 = vmatpush1.bf16.xpose.msra.mxu0 %v903
    %1339 = vmatprep.subr.bf16.mxu0 %v910
    %1340 = vmatpush1.bf16.xpose.msra.mxu0 %v909
    %1341 = vmatprep.subr.bf16.mxu0 %v916
    %1342 = vmatpush1.bf16.xpose.msra.mxu0 %v915
    %1343 = vmatprep.subr.bf16.mxu0 %v922
    %1344 = vmatpush1.bf16.xpose.msra.mxu0 %v921
    %1345 = vmatprep.subr.bf16.mxu0 %v928
    %1346 = vmatpush1.bf16.xpose.msra.mxu0 %v927
    %1347 = vmatprep.subr.bf16.mxu0 %v934
    %1348 = vmatpush1.bf16.xpose.msra.mxu0 %v933
    %1349 = vmatprep.subr.bf16.mxu0 %v940
    %1350 = vmatpush1.bf16.xpose.msra.mxu0 %v939
    %1351 = vmatprep.subr.bf16.mxu0 %v946
    %1352 = vmatpush1.bf16.xpose.msra.mxu0 %v945
    %1353 = vmatprep.mubr.bf16.mxu0 %v60
    %1354 = vmatmul.mubr.bf16.gmra.mrb[0].mxu0 %v59
    %v1355 = vpop.f32.mrb[0].mxu0
    %v1356 = vadd.f32 %v1313, %v1355
    %v1357 = vpop.f32.mrb[0].mxu0
    %v1358 = vadd.f32 %v1315, %v1357
    %v1359 = vpop.f32.mrb[0].mxu0
    %v1360 = vadd.f32 %v1317, %v1359
    %v1361 = vpop.f32.mrb[0].mxu0
    %v1362 = vadd.f32 %v1319, %v1361
    %1363 = vdwg.mxu0
    %1364 = vmatprep.subr.bf16.mxu0 %v948
    %1365 = vmatpush1.bf16.xpose.msra.mxu0 %v947
    %1366 = vmatprep.subr.bf16.mxu0 %v954
    %1367 = vmatpush1.bf16.xpose.msra.mxu0 %v953
    %1368 = vmatprep.subr.bf16.mxu0 %v960
    %1369 = vmatpush1.bf16.xpose.msra.mxu0 %v959
    %1370 = vmatprep.subr.bf16.mxu0 %v966
    %1371 = vmatpush1.bf16.xpose.msra.mxu0 %v965
    %1372 = vmatprep.subr.bf16.mxu0 %v972
    %1373 = vmatpush1.bf16.xpose.msra.mxu0 %v971
    %1374 = vmatprep.subr.bf16.mxu0 %v978
    %1375 = vmatpush1.bf16.xpose.msra.mxu0 %v977
    %1376 = vmatprep.subr.bf16.mxu0 %v984
    %1377 = vmatpush1.bf16.xpose.msra.mxu0 %v983
    %1378 = vmatprep.subr.bf16.mxu0 %v990
    %1379 = vmatpush1.bf16.xpose.msra.mxu0 %v989
    %1380 = vmatprep.subr.bf16.mxu0 %v996
    %1381 = vmatpush1.bf16.xpose.msra.mxu0 %v995
    %1382 = vmatprep.subr.bf16.mxu0 %v1002
    %1383 = vmatpush1.bf16.xpose.msra.mxu0 %v1001
    %1384 = vmatprep.subr.bf16.mxu0 %v1008
    %1385 = vmatpush1.bf16.xpose.msra.mxu0 %v1007
    %1386 = vmatprep.subr.bf16.mxu0 %v1014
    %1387 = vmatpush1.bf16.xpose.msra.mxu0 %v1013
    %1388 = vmatprep.subr.bf16.mxu0 %v1020
    %1389 = vmatpush1.bf16.xpose.msra.mxu0 %v1019
    %1390 = vmatprep.subr.bf16.mxu0 %v1026
    %1391 = vmatpush1.bf16.xpose.msra.mxu0 %v1025
    %1392 = vmatprep.subr.bf16.mxu0 %v1032
    %1393 = vmatpush1.bf16.xpose.msra.mxu0 %v1031
    %1394 = vmatprep.subr.bf16.mxu0 %v1038
    %1395 = vmatpush1.bf16.xpose.msra.mxu0 %v1037
    %1396 = vmatprep.mubr.bf16.mxu0 %v56
    %1397 = vmatmul.mubr.bf16.gmra.mrb[0].mxu0 %v55
    %v1398 = vpop.f32.mrb[0].mxu0
    %v1399 = vadd.f32 %v266, %v1398
    %v1400 = vpop.f32.mrb[0].mxu0
    %v1401 = vadd.f32 %v270, %v1400
    %v1402 = vpop.f32.mrb[0].mxu0
    %v1403 = vadd.f32 %v266, %v1402
    %v1404 = vpop.f32.mrb[0].mxu0
    %v1405 = vadd.f32 %v270, %v1404
    %1406 = vdwg.mxu0
    %1407 = vmatprep.subr.bf16.mxu0 %v950
    %1408 = vmatpush1.bf16.xpose.msra.mxu0 %v949
    %1409 = vmatprep.subr.bf16.mxu0 %v956
    %1410 = vmatpush1.bf16.xpose.msra.mxu0 %v955
    %1411 = vmatprep.subr.bf16.mxu0 %v962
    %1412 = vmatpush1.bf16.xpose.msra.mxu0 %v961
    %1413 = vmatprep.subr.bf16.mxu0 %v968
    %1414 = vmatpush1.bf16.xpose.msra.mxu0 %v967
    %1415 = vmatprep.subr.bf16.mxu0 %v974
    %1416 = vmatpush1.bf16.xpose.msra.mxu0 %v973
    %1417 = vmatprep.subr.bf16.mxu0 %v980
    %1418 = vmatpush1.bf16.xpose.msra.mxu0 %v979
    %1419 = vmatprep.subr.bf16.mxu0 %v986
    %1420 = vmatpush1.bf16.xpose.msra.mxu0 %v985
    %1421 = vmatprep.subr.bf16.mxu0 %v992
    %1422 = vmatpush1.bf16.xpose.msra.mxu0 %v991
    %1423 = vmatprep.subr.bf16.mxu0 %v998
    %1424 = vmatpush1.bf16.xpose.msra.mxu0 %v997
    %1425 = vmatprep.subr.bf16.mxu0 %v1004
    %1426 = vmatpush1.bf16.xpose.msra.mxu0 %v1003
    %1427 = vmatprep.subr.bf16.mxu0 %v1010
    %1428 = vmatpush1.bf16.xpose.msra.mxu0 %v1009
    %1429 = vmatprep.subr.bf16.mxu0 %v1016
    %1430 = vmatpush1.bf16.xpose.msra.mxu0 %v1015
    %1431 = vmatprep.subr.bf16.mxu0 %v1022
    %1432 = vmatpush1.bf16.xpose.msra.mxu0 %v1021
    %1433 = vmatprep.subr.bf16.mxu0 %v1028
    %1434 = vmatpush1.bf16.xpose.msra.mxu0 %v1027
    %1435 = vmatprep.subr.bf16.mxu0 %v1034
    %1436 = vmatpush1.bf16.xpose.msra.mxu0 %v1033
    %1437 = vmatprep.subr.bf16.mxu0 %v1040
    %1438 = vmatpush1.bf16.xpose.msra.mxu0 %v1039
    %1439 = vmatprep.mubr.bf16.mxu0 %v58
    %1440 = vmatmul.mubr.bf16.gmra.mrb[0].mxu0 %v57
    %v1441 = vpop.f32.mrb[0].mxu0
    %v1442 = vadd.f32 %v1399, %v1441
    %v1443 = vpop.f32.mrb[0].mxu0
    %v1444 = vadd.f32 %v1401, %v1443
    %v1445 = vpop.f32.mrb[0].mxu0
    %v1446 = vadd.f32 %v1403, %v1445
    %v1447 = vpop.f32.mrb[0].mxu0
    %v1448 = vadd.f32 %v1405, %v1447
    %1449 = vdwg.mxu0
    %1450 = vmatprep.subr.bf16.mxu0 %v952
    %1451 = vmatpush1.bf16.xpose.msra.mxu0 %v951
    %1452 = vmatprep.subr.bf16.mxu0 %v958
    %1453 = vmatpush1.bf16.xpose.msra.mxu0 %v957
    %1454 = vmatprep.subr.bf16.mxu0 %v964
    %1455 = vmatpush1.bf16.xpose.msra.mxu0 %v963
    %1456 = vmatprep.subr.bf16.mxu0 %v970
    %1457 = vmatpush1.bf16.xpose.msra.mxu0 %v969
    %1458 = vmatprep.subr.bf16.mxu0 %v976
    %1459 = vmatpush1.bf16.xpose.msra.mxu0 %v975
    %1460 = vmatprep.subr.bf16.mxu0 %v982
    %1461 = vmatpush1.bf16.xpose.msra.mxu0 %v981
    %1462 = vmatprep.subr.bf16.mxu0 %v988
    %1463 = vmatpush1.bf16.xpose.msra.mxu0 %v987
    %1464 = vmatprep.subr.bf16.mxu0 %v994
    %1465 = vmatpush1.bf16.xpose.msra.mxu0 %v993
    %1466 = vmatprep.subr.bf16.mxu0 %v1000
    %1467 = vmatpush1.bf16.xpose.msra.mxu0 %v999
    %1468 = vmatprep.subr.bf16.mxu0 %v1006
    %1469 = vmatpush1.bf16.xpose.msra.mxu0 %v1005
    %1470 = vmatprep.subr.bf16.mxu0 %v1012
    %1471 = vmatpush1.bf16.xpose.msra.mxu0 %v1011
    %1472 = vmatprep.subr.bf16.mxu0 %v1018
    %1473 = vmatpush1.bf16.xpose.msra.mxu0 %v1017
    %1474 = vmatprep.subr.bf16.mxu0 %v1024
    %1475 = vmatpush1.bf16.xpose.msra.mxu0 %v1023
    %1476 = vmatprep.subr.bf16.mxu0 %v1030
    %1477 = vmatpush1.bf16.xpose.msra.mxu0 %v1029
    %1478 = vmatprep.subr.bf16.mxu0 %v1036
    %1479 = vmatpush1.bf16.xpose.msra.mxu0 %v1035
    %1480 = vmatprep.subr.bf16.mxu0 %v1042
    %1481 = vmatpush1.bf16.xpose.msra.mxu0 %v1041
    %1482 = vmatprep.mubr.bf16.mxu0 %v60
    %1483 = vmatmul.mubr.bf16.gmra.mrb[0].mxu0 %v59
    %v1484 = vpop.f32.mrb[0].mxu0
    %v1485 = vadd.f32 %v1442, %v1484
    %v1486 = vpop.f32.mrb[0].mxu0
    %v1487 = vadd.f32 %v1444, %v1486
    %v1488 = vpop.f32.mrb[0].mxu0
    %v1489 = vadd.f32 %v1446, %v1488
    %v1490 = vpop.f32.mrb[0].mxu0
    %v1491 = vadd.f32 %v1448, %v1490
    %1492 = vdwg.mxu0
    %1493 = vst [vmem:[#allocation7] sm:$0xff] %v1356
    %1494 = vst [vmem:[#allocation7 + $0x8] sm:$0xff] %v1358
    %1495 = vst [vmem:[#allocation7 + $0x10] sm:$0xff] %v1485
    %1496 = vst [vmem:[#allocation7 + $0x18] sm:$0xff] %v1487
    %1497 = vst [vmem:[#allocation7 + $0x20] sm:$0xff] %v1360
    %1498 = vst [vmem:[#allocation7 + $0x28] sm:$0xff] %v1362
    %1499 = vst [vmem:[#allocation7 + $0x30] sm:$0xff] %v1489
    %1500 = vst [vmem:[#allocation7 + $0x38] sm:$0xff] %v1491
    // Predicated region
    $region22: #{tpu_custom_call.1} parent=1 // pred_check
      _
    $region23: #{tpu_custom_call.1} parent=1 // pred_check_branch
      %1502 = sbr.rel (0) target = $region25
    $region24: #{tpu_custom_call.1} parent=1 // pred_region
      %s1504 = ssub.s32 1024, 1024
      %1505 = vsyncadd [#allocation4], %s1504
      %s1506 = sshll.u32 [#allocation7], 4
      %s1507 = int_to_ptr.vmem [resolvable:$true] %s1506
      %1512 = dma.vmem_to_hbm [thread:$0]  %s1507, 1024, %s3, [#allocation4], 512, 512, 32
    $region25: #{tpu_custom_call.1} parent=1 // pred_fallthru
      _
    // Predicated region
    $region26: #{tpu_custom_call.1} parent=1 // pred_check
      _
    $region27: #{tpu_custom_call.1} parent=1 // pred_check_branch
      %1514 = sbr.rel (0) target = $region29
    $region28: #{tpu_custom_call.1} parent=1 // pred_region
      %1515 = dma.done [#allocation4], 1024
    $region29: #{tpu_custom_call.1} parent=1 // pred_fallthru
      _
    %1516 = vsyncpa [#allocation3], 1
    %1517 = vsyncpa [#allocation6], 1
    %1518 = vsyncpa [#allocation4], 1

</llo_original>
